<compile_context>
chip_gen: v6e
topology: v6e:2x2x1
jax: 0.10.0
libtpu: 0.0.40
codegen_flags: <defaults>
</compile_context>

<pallas_src>
import functools
import math

import jax
import jax.numpy as jnp
from jax import lax
from jax.experimental import pallas as pl
from jax.experimental.pallas import tpu as pltpu


_CHUNK = 512  # rows processed per in-kernel step (full 4-layer chain per chunk)


def _round_up(n, m):
    return ((n + m - 1) // m) * m


def mlp_kernel(x_ref, w0_ref, b0_ref, w1_ref, b1_ref, w2_ref, b2_ref,
               w3_ref, b3_ref, o_ref, *, chunk, compute_dtype):
    """One (tb, 10) batch tile -> (tb, 4) output tile.

    The tile is processed in `chunk`-row sub-tiles; each sub-tile runs the whole
    Linear/ReLU chain so intermediates stay in small scratch instead of tb-sized
    lane-padded VMEM slabs. Matmul operands are cast to `compute_dtype` (bf16 by
    default) with f32 MXU accumulation; biases are added in f32.
    """
    n_chunks = x_ref.shape[0] // chunk

    # Weights are tiny; cast once per grid step to the MXU operand dtype.
    w0 = w0_ref[...].astype(compute_dtype)
    w1 = w1_ref[...].astype(compute_dtype)
    w2 = w2_ref[...].astype(compute_dtype)
    w3 = w3_ref[...].astype(compute_dtype)
    b0 = b0_ref[...]
    b1 = b1_ref[...]
    b2 = b2_ref[...]
    b3 = b3_ref[...]

    def chunk_body(c, carry):
        r = pl.multiple_of(c * chunk, chunk)
        xb = x_ref[pl.ds(r, chunk), :].astype(compute_dtype)
        h = jnp.dot(xb, w0, preferred_element_type=jnp.float32) + b0
        h = jnp.maximum(h, 0.0).astype(compute_dtype)
        h = jnp.dot(h, w1, preferred_element_type=jnp.float32) + b1
        h = jnp.maximum(h, 0.0).astype(compute_dtype)
        h = jnp.dot(h, w2, preferred_element_type=jnp.float32) + b2
        h = jnp.maximum(h, 0.0).astype(compute_dtype)
        o_ref[pl.ds(r, chunk), :] = (
            jnp.dot(h, w3, preferred_element_type=jnp.float32) + b3)
        return carry

    lax.fori_loop(0, n_chunks, chunk_body, 0, unroll=(n_chunks <= 8))


def _jax_reference_forward(x2d, params, compute_dtype=jnp.float32):
    """Pure-JAX reference with the same operand-dtype convention as the kernel."""
    def layer(h, w, b, act):
        y = jnp.dot(h.astype(compute_dtype), w.astype(compute_dtype),
                    preferred_element_type=jnp.float32) + b
        return jnp.maximum(y, 0.0) if act else y

    h = layer(x2d, params["W0"], params["b0"], True)
    h = layer(h, params["W1"], params["b1"], True)
    h = layer(h, params["W2"], params["b2"], True)
    return layer(h, params["W3"], params["b3"], False)


def _resident(arr):
    """Whole-array block with a constant index map: DMA'd once, stays in VMEM."""
    return pl.BlockSpec(arr.shape, lambda i: (0, 0))


def _choose_tiles(n, block_rows):
    """Pick (batch-tile rows, in-kernel chunk rows)."""
    if n <= _CHUNK:
        tb = _round_up(max(n, 8), 8)
        return tb, tb
    block_rows = max(_CHUNK, _round_up(block_rows, _CHUNK))
    # Prefer >= 2 grid steps (so v7x's two TensorCores both get work) while never
    # exceeding block_rows or the rounded-up problem size.
    half = _round_up((n + 1) // 2, _CHUNK)
    tb = min(block_rows, half, _round_up(n, _CHUNK))
    return tb, _CHUNK


def my_network_forward(x, params, *, block_rows=8192, min_rows_for_pallas=1024,
                       use_bf16_matmul=True):
    """Forward pass of MyNetwork.

    x: any shape whose elements reshape to (-1, 10) (matches torch's x.reshape(-1, 10)).
    params: dict with W0..W3 in (in, out) layout and b0..b3 as (1, out), float32.
    use_bf16_matmul: bf16 MXU operands with f32 accumulation (fast path). Set False for
        exact float32 semantics matching the PyTorch reference.
    Returns: (N, 4) float32.
    """
    x2d = jnp.reshape(x, (-1, 10)).astype(jnp.float32)
    n = x2d.shape[0]
    compute_dtype = jnp.bfloat16 if use_bf16_matmul else jnp.float32

    # Tiny batches: pallas_call fixed overhead dominates a few-KFLOP problem.
    if n < min_rows_for_pallas:
        return _jax_reference_forward(x2d, params, compute_dtype=compute_dtype)

    tb, chunk = _choose_tiles(n, block_rows)
    grid = (pl.cdiv(n, tb),)

    # VMEM budget: x and out blocks each lane-pad to 128 f32 lanes and are
    # double-buffered (~4*tb*512 B total) plus a few MiB of per-chunk scratch.
    tile_bytes = tb * 128 * 4
    vmem_limit = int(min(max(4 * tile_bytes + (16 << 20), 32 << 20), 120 << 20))

    flops = 2 * n * (10 * 32 + 32 * 32 + 32 * 32 + 32 * 4)
    weight_bytes = sum(int(params[k].size) * 4 for k in
                       ("W0", "b0", "W1", "b1", "W2", "b2", "W3", "b3"))
    cost = pl.CostEstimate(flops=flops, transcendentals=0,
                           bytes_accessed=n * (10 + 4) * 4 + weight_bytes)

    kernel = functools.partial(mlp_kernel, chunk=chunk, compute_dtype=compute_dtype)

    return pl.pallas_call(
        kernel,
        out_shape=jax.ShapeDtypeStruct((n, 4), jnp.float32),
        grid=grid,
        in_specs=[
            pl.BlockSpec((tb, 10), lambda i: (i, 0)),      # x: streamed per grid step
            _resident(params["W0"]), _resident(params["b0"]),
            _resident(params["W1"]), _resident(params["b1"]),
            _resident(params["W2"]), _resident(params["b2"]),
            _resident(params["W3"]), _resident(params["b3"]),
        ],
        out_specs=pl.BlockSpec((tb, 4), lambda i: (i, 0)),
        compiler_params=pltpu.CompilerParams(
            dimension_semantics=("parallel",),             # v7x: shard batch over 2 TCs
            vmem_limit_bytes=vmem_limit),
        cost_estimate=cost,
    )(
        x2d,
        params["W0"], params["b0"],
        params["W1"], params["b1"],
        params["W2"], params["b2"],
        params["W3"], params["b3"],
    )


def init_params(key):
    """Deterministic init mimicking nn.Linear default: uniform(-1/sqrt(fan_in), +).

    Weights are stored transposed relative to PyTorch: shape (in, out).
    Biases are stored as (1, out) for clean 2-D broadcasting in the kernel.
    """
    sizes = [(10, 32), (32, 32), (32, 32), (32, 4)]
    params = {}
    for i, (fan_in, fan_out) in enumerate(sizes):
        key, kw, kb = jax.random.split(key, 3)
        bound = 1.0 / math.sqrt(fan_in)
        params[f"W{i}"] = jax.random.uniform(
            kw, (fan_in, fan_out), jnp.float32, -bound, bound)
        params[f"b{i}"] = jax.random.uniform(
            kb, (1, fan_out), jnp.float32, -bound, bound)
    return params


if __name__ == "__main__":
    key = jax.random.PRNGKey(0)
    key, kx_small, kx_big = jax.random.split(key, 3)

    params = init_params(key)

    # ---- Case 1: tiny batch (2, 4, 10) -> (8, 10). ----
    x_small = jax.random.normal(kx_small, (2, 4, 10), dtype=jnp.float32)
    xs2d = jnp.reshape(x_small, (-1, 10))
    ref_small_f32 = _jax_reference_forward(xs2d, params, jnp.float32)
    ref_small_bf16 = _jax_reference_forward(xs2d, params, jnp.bfloat16)

    out_small_fallback = my_network_forward(x_small, params)                      # JAX path (bf16)
    out_small_pallas = my_network_forward(x_small, params, min_rows_for_pallas=0) # Pallas bf16 path
    out_small_f32 = my_network_forward(x_small, params, min_rows_for_pallas=0,
                                       use_bf16_matmul=False)                     # Pallas f32 path
    jax.block_until_ready((out_small_fallback, out_small_pallas, out_small_f32))

    assert out_small_pallas.shape == (8, 4), out_small_pallas.shape
    assert jnp.allclose(out_small_fallback, ref_small_bf16, atol=1e-4, rtol=1e-4)
    assert jnp.allclose(out_small_pallas, ref_small_bf16, atol=1e-4, rtol=1e-4)
    assert jnp.allclose(out_small_pallas, ref_small_f32, atol=5e-2, rtol=5e-2)
    assert jnp.allclose(out_small_f32, ref_small_f32, atol=1e-4, rtol=1e-4)

    # ---- Case 2: larger batch, N = 375*8 = 3000 rows (not a tile multiple). ----
    # Exercises the multi-step grid (tb=1536, 2 steps), resident weight blocks, the
    # in-kernel 512-row chunk loop, and the unpadded ragged final block.
    x_big = jax.random.normal(kx_big, (375, 8, 10), dtype=jnp.float32)
    xb2d = jnp.reshape(x_big, (-1, 10))
    ref_big_f32 = _jax_reference_forward(xb2d, params, jnp.float32)
    ref_big_bf16 = _jax_reference_forward(xb2d, params, jnp.bfloat16)

    out_big = my_network_forward(x_big, params)                                   # Pallas bf16 path
    out_big_f32 = my_network_forward(x_big, params, use_bf16_matmul=False)        # Pallas f32 path
    jax.block_until_ready((out_big, out_big_f32))

    assert out_big.shape == (3000, 4), out_big.shape
    assert jnp.allclose(out_big, ref_big_bf16, atol=1e-4, rtol=1e-4), "bf16 path mismatch"
    assert jnp.allclose(out_big, ref_big_f32, atol=5e-2, rtol=5e-2), "bf16 drift too large"
    assert jnp.allclose(out_big_f32, ref_big_f32, atol=1e-4, rtol=1e-4), "f32 path mismatch"

    print("KERNEL_OK")
</pallas_src>

<mosaic_0001>
module attributes {stable_mosaic.version = 11 : i64} {
  func.func @mlp_kernel(%arg0: i32, %arg1: memref<8x10xf32, #tpu.memory_space<vmem>>, %arg2: memref<10x32xf32, #tpu.memory_space<vmem>>, %arg3: memref<1x32xf32, #tpu.memory_space<vmem>>, %arg4: memref<32x32xf32, #tpu.memory_space<vmem>>, %arg5: memref<1x32xf32, #tpu.memory_space<vmem>>, %arg6: memref<32x32xf32, #tpu.memory_space<vmem>>, %arg7: memref<1x32xf32, #tpu.memory_space<vmem>>, %arg8: memref<32x4xf32, #tpu.memory_space<vmem>>, %arg9: memref<1x4xf32, #tpu.memory_space<vmem>>, %arg10: memref<8x4xf32, #tpu.memory_space<vmem>>) attributes {dimension_semantics = [#tpu.dimension_semantics<parallel>], iteration_bounds = array<i64: 1>, scalar_prefetch = 0 : i64, scratch_operands = 0 : i64, tpu.core_type = #tpu.core_type<tc>, window_params = [{transform_indices = @transform_0, window_bounds = array<i64: 8, 10>}, {pipeline_mode = #tpu.pipeline_mode<synchronous>, transform_indices = @transform_1, window_bounds = array<i64: 10, 32>}, {pipeline_mode = #tpu.pipeline_mode<synchronous>, transform_indices = @transform_2, window_bounds = array<i64: 1, 32>}, {pipeline_mode = #tpu.pipeline_mode<synchronous>, transform_indices = @transform_3, window_bounds = array<i64: 32, 32>}, {pipeline_mode = #tpu.pipeline_mode<synchronous>, transform_indices = @transform_4, window_bounds = array<i64: 1, 32>}, {pipeline_mode = #tpu.pipeline_mode<synchronous>, transform_indices = @transform_5, window_bounds = array<i64: 32, 32>}, {pipeline_mode = #tpu.pipeline_mode<synchronous>, transform_indices = @transform_6, window_bounds = array<i64: 1, 32>}, {pipeline_mode = #tpu.pipeline_mode<synchronous>, transform_indices = @transform_7, window_bounds = array<i64: 32, 4>}, {pipeline_mode = #tpu.pipeline_mode<synchronous>, transform_indices = @transform_8, window_bounds = array<i64: 1, 4>}, {transform_indices = @transform_9, window_bounds = array<i64: 8, 4>}]} {
    %c0 = arith.constant 0 : index
    %c0_0 = arith.constant 0 : index
    %0 = vector.load %arg2[%c0, %c0_0] : memref<10x32xf32, #tpu.memory_space<vmem>>, vector<10x32xf32>
    %1 = arith.truncf %0 : vector<10x32xf32> to vector<10x32xbf16>
    %c0_1 = arith.constant 0 : index
    %c0_2 = arith.constant 0 : index
    %2 = vector.load %arg4[%c0_1, %c0_2] : memref<32x32xf32, #tpu.memory_space<vmem>>, vector<32x32xf32>
    %3 = arith.truncf %2 : vector<32x32xf32> to vector<32x32xbf16>
    %c0_3 = arith.constant 0 : index
    %c0_4 = arith.constant 0 : index
    %4 = vector.load %arg6[%c0_3, %c0_4] : memref<32x32xf32, #tpu.memory_space<vmem>>, vector<32x32xf32>
    %5 = arith.truncf %4 : vector<32x32xf32> to vector<32x32xbf16>
    %c0_5 = arith.constant 0 : index
    %c0_6 = arith.constant 0 : index
    %6 = vector.load %arg8[%c0_5, %c0_6] : memref<32x4xf32, #tpu.memory_space<vmem>>, vector<32x4xf32>
    %7 = arith.truncf %6 : vector<32x4xf32> to vector<32x4xbf16>
    %c0_7 = arith.constant 0 : index
    %c0_8 = arith.constant 0 : index
    %8 = vector.load %arg3[%c0_7, %c0_8] : memref<1x32xf32, #tpu.memory_space<vmem>>, vector<1x32xf32>
    %c0_9 = arith.constant 0 : index
    %c0_10 = arith.constant 0 : index
    %9 = vector.load %arg5[%c0_9, %c0_10] : memref<1x32xf32, #tpu.memory_space<vmem>>, vector<1x32xf32>
    %c0_11 = arith.constant 0 : index
    %c0_12 = arith.constant 0 : index
    %10 = vector.load %arg7[%c0_11, %c0_12] : memref<1x32xf32, #tpu.memory_space<vmem>>, vector<1x32xf32>
    %c0_13 = arith.constant 0 : index
    %c0_14 = arith.constant 0 : index
    %11 = vector.load %arg9[%c0_13, %c0_14] : memref<1x4xf32, #tpu.memory_space<vmem>>, vector<1x4xf32>
    %c0_i32 = arith.constant 0 : i32
    %c8_i32 = arith.constant 8 : i32
    %12 = arith.muli %c0_i32, %c8_i32 : i32
    %13 = tpu.assume_multiple %12, 8 : i32
    %14 = arith.index_cast %13 : i32 to index
    %c0_15 = arith.constant 0 : index
    %15 = vector.load %arg1[%14, %c0_15] : memref<8x10xf32, #tpu.memory_space<vmem>>, vector<8x10xf32>
    %16 = arith.truncf %15 : vector<8x10xf32> to vector<8x10xbf16>
    %cst = arith.constant dense<0.000000e+00> : vector<8x32xf32>
    %17 = tpu.matmul %16, %1, %cst {dimension_numbers = #tpu.dot_dimension_numbers<[1], [0], [0], [1], [0, 0, 1, 1], [], []>} : vector<8x10xbf16>, vector<10x32xbf16>, vector<8x32xf32> -> vector<8x32xf32>
    %18 = vector.broadcast %8 : vector<1x32xf32> to vector<8x32xf32>
    %19 = arith.addf %17, %18 : vector<8x32xf32>
    %cst_16 = arith.constant 0.000000e+00 : f32
    %20 = vector.broadcast %cst_16 : f32 to vector<8x32xf32>
    %21 = arith.maximumf %19, %20 : vector<8x32xf32>
    %22 = arith.truncf %21 : vector<8x32xf32> to vector<8x32xbf16>
    %cst_17 = arith.constant dense<0.000000e+00> : vector<8x32xf32>
    %23 = tpu.matmul %22, %3, %cst_17 {dimension_numbers = #tpu.dot_dimension_numbers<[1], [0], [0], [1], [0, 0, 1, 1], [], []>} : vector<8x32xbf16>, vector<32x32xbf16>, vector<8x32xf32> -> vector<8x32xf32>
    %24 = vector.broadcast %9 : vector<1x32xf32> to vector<8x32xf32>
    %25 = arith.addf %23, %24 : vector<8x32xf32>
    %cst_18 = arith.constant 0.000000e+00 : f32
    %26 = vector.broadcast %cst_18 : f32 to vector<8x32xf32>
    %27 = arith.maximumf %25, %26 : vector<8x32xf32>
    %28 = arith.truncf %27 : vector<8x32xf32> to vector<8x32xbf16>
    %cst_19 = arith.constant dense<0.000000e+00> : vector<8x32xf32>
    %29 = tpu.matmul %28, %5, %cst_19 {dimension_numbers = #tpu.dot_dimension_numbers<[1], [0], [0], [1], [0, 0, 1, 1], [], []>} : vector<8x32xbf16>, vector<32x32xbf16>, vector<8x32xf32> -> vector<8x32xf32>
    %30 = vector.broadcast %10 : vector<1x32xf32> to vector<8x32xf32>
    %31 = arith.addf %29, %30 : vector<8x32xf32>
    %cst_20 = arith.constant 0.000000e+00 : f32
    %32 = vector.broadcast %cst_20 : f32 to vector<8x32xf32>
    %33 = arith.maximumf %31, %32 : vector<8x32xf32>
    %34 = arith.truncf %33 : vector<8x32xf32> to vector<8x32xbf16>
    %cst_21 = arith.constant dense<0.000000e+00> : vector<8x4xf32>
    %35 = tpu.matmul %34, %7, %cst_21 {dimension_numbers = #tpu.dot_dimension_numbers<[1], [0], [0], [1], [0, 0, 1, 1], [], []>} : vector<8x32xbf16>, vector<32x4xbf16>, vector<8x4xf32> -> vector<8x4xf32>
    %36 = vector.broadcast %11 : vector<1x4xf32> to vector<8x4xf32>
    %37 = arith.addf %35, %36 : vector<8x4xf32>
    %38 = arith.index_cast %13 : i32 to index
    %c0_22 = arith.constant 0 : index
    %39 = vector.load %arg10[%38, %c0_22] : memref<8x4xf32, #tpu.memory_space<vmem>>, vector<8x4xf32>
    tpu.vector_store %arg10[%38, %c0_22], %37 {strides = array<i32>} : memref<8x4xf32, #tpu.memory_space<vmem>>, vector<8x4xf32>,
    %c1_i32 = arith.constant 1 : i32
    return
  }
  func.func @transform_0(%arg0: i32) -> (i32, i32) {
    %c0_i32 = arith.constant 0 : i32
    %c0_i32_0 = arith.constant 0 : i32
    return %arg0, %c0_i32 : i32, i32
  }
  func.func @transform_1(%arg0: i32) -> (i32, i32) {
    %c0_i32 = arith.constant 0 : i32
    %c0_i32_0 = arith.constant 0 : i32
    %c0_i32_1 = arith.constant 0 : i32
    return %c0_i32, %c0_i32_0 : i32, i32
  }
  func.func @transform_2(%arg0: i32) -> (i32, i32) {
    %c0_i32 = arith.constant 0 : i32
    %c0_i32_0 = arith.constant 0 : i32
    %c0_i32_1 = arith.constant 0 : i32
    return %c0_i32, %c0_i32_0 : i32, i32
  }
  func.func @transform_3(%arg0: i32) -> (i32, i32) {
    %c0_i32 = arith.constant 0 : i32
    %c0_i32_0 = arith.constant 0 : i32
    %c0_i32_1 = arith.constant 0 : i32
    return %c0_i32, %c0_i32_0 : i32, i32
  }
  func.func @transform_4(%arg0: i32) -> (i32, i32) {
    %c0_i32 = arith.constant 0 : i32
    %c0_i32_0 = arith.constant 0 : i32
    %c0_i32_1 = arith.constant 0 : i32
    return %c0_i32, %c0_i32_0 : i32, i32
  }
  func.func @transform_5(%arg0: i32) -> (i32, i32) {
    %c0_i32 = arith.constant 0 : i32
    %c0_i32_0 = arith.constant 0 : i32
    %c0_i32_1 = arith.constant 0 : i32
    return %c0_i32, %c0_i32_0 : i32, i32
  }
  func.func @transform_6(%arg0: i32) -> (i32, i32) {
    %c0_i32 = arith.constant 0 : i32
    %c0_i32_0 = arith.constant 0 : i32
    %c0_i32_1 = arith.constant 0 : i32
    return %c0_i32, %c0_i32_0 : i32, i32
  }
  func.func @transform_7(%arg0: i32) -> (i32, i32) {
    %c0_i32 = arith.constant 0 : i32
    %c0_i32_0 = arith.constant 0 : i32
    %c0_i32_1 = arith.constant 0 : i32
    return %c0_i32, %c0_i32_0 : i32, i32
  }
  func.func @transform_8(%arg0: i32) -> (i32, i32) {
    %c0_i32 = arith.constant 0 : i32
    %c0_i32_0 = arith.constant 0 : i32
    %c0_i32_1 = arith.constant 0 : i32
    return %c0_i32, %c0_i32_0 : i32, i32
  }
  func.func @transform_9(%arg0: i32) -> (i32, i32) {
    %c0_i32 = arith.constant 0 : i32
    %c0_i32_0 = arith.constant 0 : i32
    return %arg0, %c0_i32 : i32, i32
  }
}

</mosaic_0001>

<llo_original>
// kernel: tpu_custom_call.1
$region0: #{tpu_custom_call.1}
  #allocation0 [shape = 'u32[]', space=smem, size = 0x4, offset = 0x4, fixed_abs, tag = 'smem constant byte address 0x4 - core index']
  #allocation1 [shape = 'u32[144,128]{1,0:T(1,128)}', space=vmem, size = 0x12000, scoped, tag = 'internal scratch']
  %s0 = inlined_call_operand.vmem [shape: f32[8,10], index: 0, kind: input, shape index: {}]
  %s1 = inlined_call_operand.hbm [shape: f32[10,32], index: 1, kind: input, shape index: {}]
  %s2 = inlined_call_operand.vmem [shape: f32[1,32], index: 2, kind: input, shape index: {}]
  %s3 = inlined_call_operand.vmem [shape: f32[32,32], index: 3, kind: input, shape index: {}]
  %s4 = inlined_call_operand.hbm [shape: f32[1,32], index: 4, kind: input, shape index: {}]
  %s5 = inlined_call_operand.hbm [shape: f32[32,32], index: 5, kind: input, shape index: {}]
  %s6 = inlined_call_operand.vmem [shape: f32[1,32], index: 6, kind: input, shape index: {}]
  %s7 = inlined_call_operand.vmem [shape: f32[32,4], index: 7, kind: input, shape index: {}]
  %s8 = inlined_call_operand.vmem [shape: f32[1,4], index: 8, kind: input, shape index: {}]
  %s9 = inlined_call_operand.vmem [shape: f32[8,4], index: 9, kind: output, shape index: {}]
  %s10 = sld [smem:[#allocation0]]
  $region58: #{tpu_custom_call.1} parent=0
    _
  %s12 = ssub.s32 1, %s10
  %s13 = scalar_select 0, %s12, %s10
  $region1: #{tpu_custom_call.1} parent=0
    #allocation2 [shape = 'u8[8192]{0}', space=vmem, size = 0x2000, scoped, tag = 'input window, operand 1, single buffered']
    #allocation3 [shape = 's32[1]{0}', space=sflag, size = 0x4, scoped, tag = 'scoped memory for tpu_custom_call.1']
    #allocation4 [shape = 'u8[512]{0}', space=vmem, size = 0x400, scoped, tag = 'input window, operand 4, single buffered']
    #allocation5 [shape = 's32[1]{0}', space=sflag, size = 0x4, scoped, tag = 'scoped memory for tpu_custom_call.1']
    #allocation6 [shape = 'u8[16384]{0}', space=vmem, size = 0x4000, scoped, tag = 'input window, operand 5, single buffered']
    %14 = vsyncpa [#allocation3], 0
    %15 = vsyncpa [#allocation5], 0
    // Predicated region
    $region2: #{tpu_custom_call.1} parent=1 // pred_check
      _
    $region3: #{tpu_custom_call.1} parent=1 // pred_check_branch
      %17 = sbr.rel (0) target = $region5
    $region4: #{tpu_custom_call.1} parent=1 // pred_region
      _
    $region5: #{tpu_custom_call.1} parent=1 // pred_fallthru
      _
    // Predicated region
    $region6: #{tpu_custom_call.1} parent=1 // pred_check
      _
    $region7: #{tpu_custom_call.1} parent=1 // pred_check_branch
      %19 = sbr.rel (0) target = $region9
    $region8: #{tpu_custom_call.1} parent=1 // pred_region
      %s21 = ssub.s32 256, 256
      %22 = vsyncadd [#allocation3], %s21
      %s23 = sshll.u32 [#allocation2], 4
      %s24 = int_to_ptr.vmem [resolvable:$true] %s23
      %29 = dma.hbm_to_vmem [thread:$0]  %s1, 256, %s24, [#allocation3], 128, 128, 8
    $region9: #{tpu_custom_call.1} parent=1 // pred_fallthru
      _
    // Predicated region
    $region10: #{tpu_custom_call.1} parent=1 // pred_check
      _
    $region11: #{tpu_custom_call.1} parent=1 // pred_check_branch
      %31 = sbr.rel (0) target = $region13
    $region12: #{tpu_custom_call.1} parent=1 // pred_region
      _
    $region13: #{tpu_custom_call.1} parent=1 // pred_fallthru
      _
    // Predicated region
    $region14: #{tpu_custom_call.1} parent=1 // pred_check
      _
    $region15: #{tpu_custom_call.1} parent=1 // pred_check_branch
      %33 = sbr.rel (0) target = $region17
    $region16: #{tpu_custom_call.1} parent=1 // pred_region
      _
    $region17: #{tpu_custom_call.1} parent=1 // pred_fallthru
      _
    // Predicated region
    $region18: #{tpu_custom_call.1} parent=1 // pred_check
      _
    $region19: #{tpu_custom_call.1} parent=1 // pred_check_branch
      %35 = sbr.rel (0) target = $region21
    $region20: #{tpu_custom_call.1} parent=1 // pred_region
      %s37 = ssub.s32 16, 16
      %38 = vsyncadd [#allocation5], %s37
      %s40 = sshll.u32 [#allocation4], 4
      %s41 = int_to_ptr.vmem [resolvable:$true] %s40
      %43 = dma.hbm_to_vmem [thread:$0]  %s4, 16, %s41, [#allocation5]
    $region21: #{tpu_custom_call.1} parent=1 // pred_fallthru
      _
    // Predicated region
    $region22: #{tpu_custom_call.1} parent=1 // pred_check
      _
    $region23: #{tpu_custom_call.1} parent=1 // pred_check_branch
      %45 = sbr.rel (0) target = $region25
    $region24: #{tpu_custom_call.1} parent=1 // pred_region
      %s47 = ssub.s32 512, 512
      %48 = vsyncadd [#allocation5], %s47
      %s49 = sshll.u32 [#allocation6], 4
      %s50 = int_to_ptr.vmem [resolvable:$true] %s49
      %55 = dma.hbm_to_vmem [thread:$0]  %s5, 512, %s50, [#allocation5], 128, 128, 8
    $region25: #{tpu_custom_call.1} parent=1 // pred_fallthru
      _
    // Predicated region
    $region26: #{tpu_custom_call.1} parent=1 // pred_check
      _
    $region27: #{tpu_custom_call.1} parent=1 // pred_check_branch
      %57 = sbr.rel (0) target = $region29
    $region28: #{tpu_custom_call.1} parent=1 // pred_region
      _
    $region29: #{tpu_custom_call.1} parent=1 // pred_fallthru
      _
    // Predicated region
    $region30: #{tpu_custom_call.1} parent=1 // pred_check
      _
    $region31: #{tpu_custom_call.1} parent=1 // pred_check_branch
      %59 = sbr.rel (0) target = $region33
    $region32: #{tpu_custom_call.1} parent=1 // pred_region
      _
    $region33: #{tpu_custom_call.1} parent=1 // pred_fallthru
      _
    // Predicated region
    $region34: #{tpu_custom_call.1} parent=1 // pred_check
      _
    $region35: #{tpu_custom_call.1} parent=1 // pred_check_branch
      %61 = sbr.rel (0) target = $region37
    $region36: #{tpu_custom_call.1} parent=1 // pred_region
      _
    $region37: #{tpu_custom_call.1} parent=1 // pred_fallthru
      _
    // Predicated region
    $region38: #{tpu_custom_call.1} parent=1 // pred_check
      _
    $region39: #{tpu_custom_call.1} parent=1 // pred_check_branch
      %63 = sbr.rel (0) target = $region41
    $region40: #{tpu_custom_call.1} parent=1 // pred_region
      %64 = dma.done [#allocation3], 256
    $region41: #{tpu_custom_call.1} parent=1 // pred_fallthru
      _
    // Predicated region
    $region42: #{tpu_custom_call.1} parent=1 // pred_check
      _
    $region43: #{tpu_custom_call.1} parent=1 // pred_check_branch
      %66 = sbr.rel (0) target = $region45
    $region44: #{tpu_custom_call.1} parent=1 // pred_region
      %67 = dma.done [#allocation5], 16
    $region45: #{tpu_custom_call.1} parent=1 // pred_fallthru
      _
    // Predicated region
    $region46: #{tpu_custom_call.1} parent=1 // pred_check
      _
    $region47: #{tpu_custom_call.1} parent=1 // pred_check_branch
      %69 = sbr.rel (0) target = $region49
    $region48: #{tpu_custom_call.1} parent=1 // pred_region
      %70 = dma.done [#allocation5], 512
    $region49: #{tpu_custom_call.1} parent=1 // pred_fallthru
      _
    %v72 = vld [vmem:[#allocation2] sm:$0xff]
    %v73 = vld [vmem:[#allocation2 + $0x8] sm:$0x3]
    %v74 = vpack.c.bf16 %v73, %v72
    %v75 = vld [vmem:[%s3] sm:$0xff]
    %v76 = vld [vmem:[%s3 + $0x8] sm:$0xff]
    %v77 = vld [vmem:[%s3 + $0x10] sm:$0xff]
    %v78 = vld [vmem:[%s3 + $0x18] sm:$0xff]
    %v79 = vpack.c.bf16 %v76, %v75
    %v80 = vpack.c.bf16 %v78, %v77
    %v81 = vld [vmem:[#allocation6] sm:$0xff]
    %v82 = vld [vmem:[#allocation6 + $0x8] sm:$0xff]
    %v83 = vld [vmem:[#allocation6 + $0x10] sm:$0xff]
    %v84 = vld [vmem:[#allocation6 + $0x18] sm:$0xff]
    %v85 = vpack.c.bf16 %v82, %v81
    %v86 = vpack.c.bf16 %v84, %v83
    %v87 = vld [vmem:[%s7] sm:$0xff]
    %v88 = vld [vmem:[%s7 + $0x8] sm:$0xff]
    %v89 = vld [vmem:[%s7 + $0x10] sm:$0xff]
    %v90 = vld [vmem:[%s7 + $0x18] sm:$0xff]
    %v91 = vpack.c.bf16 %v88, %v87
    %v92 = vpack.c.bf16 %v90, %v89
    %v93 = vld [vmem:[%s2] sm:$0x1]
    %v94 = vld [vmem:[#allocation4] sm:$0x1]
    %v95 = vld [vmem:[%s6] sm:$0x1]
    %v96 = vld [vmem:[%s8] sm:$0x1]
    %v97 = vld [vmem:[%s0] sm:$0xff]
    %v98 = vpack.c.bf16 %v97, %v97
    %v100 = vlaneseq
    %v101 = vshrl.u32 %v100, 7
    %v102 = vsub.s32 0, %v101
    %v103 = vrot.slane %v93, %v102
    %vm105 = vcmask 80896
    %v107 = vsel %vm105, %v98, 0
    %vm109 = vcmask 1044480
    %v111 = vsel %vm109, %v74, 0
    %113 = vmatprep.subr.bf16.mxu0 0
    %114 = vmatpush1.bf16.msra.mxu0 0
    %115 = vmatprep.subr.bf16.mxu0 0
    %116 = vmatpush1.bf16.msra.mxu0 0
    %117 = vmatprep.subr.bf16.mxu0 0
    %118 = vmatpush1.bf16.msra.mxu0 0
    %119 = vmatprep.subr.bf16.mxu0 0
    %120 = vmatpush1.bf16.msra.mxu0 0
    %121 = vmatprep.subr.bf16.mxu0 0
    %122 = vmatpush1.bf16.msra.mxu0 0
    %123 = vmatprep.subr.bf16.mxu0 0
    %124 = vmatpush1.bf16.msra.mxu0 0
    %125 = vmatprep.subr.bf16.mxu0 0
    %126 = vmatpush1.bf16.msra.mxu0 0
    %127 = vmatprep.subr.bf16.mxu0 0
    %128 = vmatpush1.bf16.msra.mxu0 %v111
    %129 = vmatprep.subr.bf16.mxu0 0
    %130 = vmatpush2.bf16.msra.mxu0 0
    %131 = vmatprep.subr.bf16.mxu0 0
    %132 = vmatpush2.bf16.msra.mxu0 0
    %133 = vmatprep.subr.bf16.mxu0 0
    %134 = vmatpush2.bf16.msra.mxu0 0
    %135 = vmatprep.subr.bf16.mxu0 0
    %136 = vmatpush2.bf16.msra.mxu0 0
    %137 = vmatprep.subr.bf16.mxu0 0
    %138 = vmatpush2.bf16.msra.mxu0 0
    %139 = vmatprep.subr.bf16.mxu0 0
    %140 = vmatpush2.bf16.msra.mxu0 0
    %141 = vmatprep.subr.bf16.mxu0 0
    %142 = vmatpush2.bf16.msra.mxu0 0
    %143 = vmatprep.subr.bf16.mxu0 0
    %144 = vmatpush2.bf16.msra.mxu0 0
    %145 = vmatprep.mubr.bf16.mxu0 0
    %146 = vmatmul.mubr.bf16.gmra.mxu0 %v107
    %v147 = vpop.f32.mrf.mxu0
    %v148 = vadd.f32 %v103, %v147
    %v149 = vpop.f32.mrf.mxu0
    %v150 = vpop.f32.mrf.mxu0
    %v151 = vpop.f32.mrf.mxu0
    %152 = vdwg.mxu0
    %v153 = vmax.f32 %v148, 0.0
    %v154 = vpack.c.bf16 %v153, %v153
    %v156 = vlaneseq
    %v157 = vshrl.u32 %v156, 7
    %v158 = vsub.s32 0, %v157
    %v159 = vrot.slane %v94, %v158
    %vm161 = vcmask 261120
    %v163 = vsel %vm161, %v154, 0
    %165 = vmatprep.subr.bf16.mxu0 0
    %166 = vmatpush1.bf16.msra.mxu0 0
    %167 = vmatprep.subr.bf16.mxu0 0
    %168 = vmatpush1.bf16.msra.mxu0 0
    %169 = vmatprep.subr.bf16.mxu0 0
    %170 = vmatpush1.bf16.msra.mxu0 0
    %171 = vmatprep.subr.bf16.mxu0 0
    %172 = vmatpush1.bf16.msra.mxu0 0
    %173 = vmatprep.subr.bf16.mxu0 0
    %174 = vmatpush1.bf16.msra.mxu0 0
    %175 = vmatprep.subr.bf16.mxu0 0
    %176 = vmatpush1.bf16.msra.mxu0 0
    %177 = vmatprep.subr.bf16.mxu0 0
    %178 = vmatpush1.bf16.msra.mxu0 %v80
    %179 = vmatprep.subr.bf16.mxu0 0
    %180 = vmatpush1.bf16.msra.mxu0 %v79
    %181 = vmatprep.subr.bf16.mxu0 0
    %182 = vmatpush2.bf16.msra.mxu0 0
    %183 = vmatprep.subr.bf16.mxu0 0
    %184 = vmatpush2.bf16.msra.mxu0 0
    %185 = vmatprep.subr.bf16.mxu0 0
    %186 = vmatpush2.bf16.msra.mxu0 0
    %187 = vmatprep.subr.bf16.mxu0 0
    %188 = vmatpush2.bf16.msra.mxu0 0
    %189 = vmatprep.subr.bf16.mxu0 0
    %190 = vmatpush2.bf16.msra.mxu0 0
    %191 = vmatprep.subr.bf16.mxu0 0
    %192 = vmatpush2.bf16.msra.mxu0 0
    %193 = vmatprep.subr.bf16.mxu0 0
    %194 = vmatpush2.bf16.msra.mxu0 0
    %195 = vmatprep.subr.bf16.mxu0 0
    %196 = vmatpush2.bf16.msra.mxu0 0
    %197 = vmatprep.mubr.bf16.mxu0 0
    %198 = vmatmul.mubr.bf16.gmra.mxu0 %v163
    %v199 = vpop.f32.mrf.mxu0
    %v200 = vadd.f32 %v159, %v199
    %v201 = vpop.f32.mrf.mxu0
    %v202 = vpop.f32.mrf.mxu0
    %v203 = vpop.f32.mrf.mxu0
    %204 = vdwg.mxu0
    %v205 = vmax.f32 %v200, 0.0
    %v206 = vpack.c.bf16 %v205, %v205
    %v208 = vlaneseq
    %v209 = vshrl.u32 %v208, 7
    %v210 = vsub.s32 0, %v209
    %v211 = vrot.slane %v95, %v210
    %v214 = vsel %vm161, %v206, 0
    %216 = vmatprep.subr.bf16.mxu0 0
    %217 = vmatpush1.bf16.msra.mxu0 0
    %218 = vmatprep.subr.bf16.mxu0 0
    %219 = vmatpush1.bf16.msra.mxu0 0
    %220 = vmatprep.subr.bf16.mxu0 0
    %221 = vmatpush1.bf16.msra.mxu0 0
    %222 = vmatprep.subr.bf16.mxu0 0
    %223 = vmatpush1.bf16.msra.mxu0 0
    %224 = vmatprep.subr.bf16.mxu0 0
    %225 = vmatpush1.bf16.msra.mxu0 0
    %226 = vmatprep.subr.bf16.mxu0 0
    %227 = vmatpush1.bf16.msra.mxu0 0
    %228 = vmatprep.subr.bf16.mxu0 0
    %229 = vmatpush1.bf16.msra.mxu0 %v86
    %230 = vmatprep.subr.bf16.mxu0 0
    %231 = vmatpush1.bf16.msra.mxu0 %v85
    %232 = vmatprep.subr.bf16.mxu0 0
    %233 = vmatpush2.bf16.msra.mxu0 0
    %234 = vmatprep.subr.bf16.mxu0 0
    %235 = vmatpush2.bf16.msra.mxu0 0
    %236 = vmatprep.subr.bf16.mxu0 0
    %237 = vmatpush2.bf16.msra.mxu0 0
    %238 = vmatprep.subr.bf16.mxu0 0
    %239 = vmatpush2.bf16.msra.mxu0 0
    %240 = vmatprep.subr.bf16.mxu0 0
    %241 = vmatpush2.bf16.msra.mxu0 0
    %242 = vmatprep.subr.bf16.mxu0 0
    %243 = vmatpush2.bf16.msra.mxu0 0
    %244 = vmatprep.subr.bf16.mxu0 0
    %245 = vmatpush2.bf16.msra.mxu0 0
    %246 = vmatprep.subr.bf16.mxu0 0
    %247 = vmatpush2.bf16.msra.mxu0 0
    %248 = vmatprep.mubr.bf16.mxu0 0
    %249 = vmatmul.mubr.bf16.gmra.mxu0 %v214
    %v250 = vpop.f32.mrf.mxu0
    %v251 = vadd.f32 %v211, %v250
    %v252 = vpop.f32.mrf.mxu0
    %v253 = vpop.f32.mrf.mxu0
    %v254 = vpop.f32.mrf.mxu0
    %255 = vdwg.mxu0
    %v256 = vmax.f32 %v251, 0.0
    %v257 = vpack.c.bf16 %v256, %v256
    %v259 = vlaneseq
    %v260 = vshrl.u32 %v259, 7
    %v261 = vsub.s32 0, %v260
    %v262 = vrot.slane %v96, %v261
    %v265 = vsel %vm161, %v257, 0
    %267 = vmatprep.subr.bf16.mxu0 0
    %268 = vmatpush1.bf16.msra.mxu0 0
    %269 = vmatprep.subr.bf16.mxu0 0
    %270 = vmatpush1.bf16.msra.mxu0 0
    %271 = vmatprep.subr.bf16.mxu0 0
    %272 = vmatpush1.bf16.msra.mxu0 0
    %273 = vmatprep.subr.bf16.mxu0 0
    %274 = vmatpush1.bf16.msra.mxu0 0
    %275 = vmatprep.subr.bf16.mxu0 0
    %276 = vmatpush1.bf16.msra.mxu0 0
    %277 = vmatprep.subr.bf16.mxu0 0
    %278 = vmatpush1.bf16.msra.mxu0 0
    %279 = vmatprep.subr.bf16.mxu0 0
    %280 = vmatpush1.bf16.msra.mxu0 %v92
    %281 = vmatprep.subr.bf16.mxu0 0
    %282 = vmatpush1.bf16.msra.mxu0 %v91
    %283 = vmatprep.subr.bf16.mxu0 0
    %284 = vmatpush2.bf16.msra.mxu0 0
    %285 = vmatprep.subr.bf16.mxu0 0
    %286 = vmatpush2.bf16.msra.mxu0 0
    %287 = vmatprep.subr.bf16.mxu0 0
    %288 = vmatpush2.bf16.msra.mxu0 0
    %289 = vmatprep.subr.bf16.mxu0 0
    %290 = vmatpush2.bf16.msra.mxu0 0
    %291 = vmatprep.subr.bf16.mxu0 0
    %292 = vmatpush2.bf16.msra.mxu0 0
    %293 = vmatprep.subr.bf16.mxu0 0
    %294 = vmatpush2.bf16.msra.mxu0 0
    %295 = vmatprep.subr.bf16.mxu0 0
    %296 = vmatpush2.bf16.msra.mxu0 0
    %297 = vmatprep.subr.bf16.mxu0 0
    %298 = vmatpush2.bf16.msra.mxu0 0
    %299 = vmatprep.mubr.bf16.mxu0 0
    %300 = vmatmul.mubr.bf16.gmra.mxu0 %v265
    %v301 = vpop.f32.mrf.mxu0
    %v302 = vadd.f32 %v262, %v301
    %v303 = vpop.f32.mrf.mxu0
    %v304 = vpop.f32.mrf.mxu0
    %v305 = vpop.f32.mrf.mxu0
    %306 = vdwg.mxu0
    %vm307 = vcmask 31744
    %308 = vst.msk [vmem:[%s9] sm:$0xff] %vm307, %v302
    // Predicated region
    $region50: #{tpu_custom_call.1} parent=1 // pred_check
      _
    $region51: #{tpu_custom_call.1} parent=1 // pred_check_branch
      %310 = sbr.rel (0) target = $region53
    $region52: #{tpu_custom_call.1} parent=1 // pred_region
      _
    $region53: #{tpu_custom_call.1} parent=1 // pred_fallthru
      _
    // Predicated region
    $region54: #{tpu_custom_call.1} parent=1 // pred_check
      _
    $region55: #{tpu_custom_call.1} parent=1 // pred_check_branch
      %312 = sbr.rel (0) target = $region57
    $region56: #{tpu_custom_call.1} parent=1 // pred_region
      _
    $region57: #{tpu_custom_call.1} parent=1 // pred_fallthru
      _
    %313 = vsyncpa [#allocation3], 1
    %314 = vsyncpa [#allocation5], 1

</llo_original>
